<compile_context>
chip_gen: v7x
topology: tpu7x:2x2x1
jax: 0.10.0
libtpu: 0.0.40
codegen_flags: <defaults>
</compile_context>

<pallas_src>
import math
import jax
import jax.numpy as jnp
from jax.experimental import pallas as pl
from jax.experimental.pallas import tpu as pltpu  # noqa: F401  (kept for clarity / future use)

# Small, shape-consistent config (hidden divisible by num heads).
B, L, D, H = 2, 8, 32, 4
DH = D // H
LN_EPS = 1e-12


def _gelu(x):
    # exact (erf-based) gelu, same as the PyTorch reference
    return x * 0.5 * (1.0 + jax.lax.erf(x / math.sqrt(2.0)))


def bert_selfatt_kernel(x_ref, amask_ref, tq_ref, hmask_ref, wslab_ref, bslab_ref, out_ref):
    bf16 = jnp.bfloat16
    x = x_ref[...]                           # (B*L, D) f32, both batches stacked on sublanes
    hmask = hmask_ref[...]                   # (H*L, D) f32: row h*L+i keeps only head-h lanes

    # Fused projection for BOTH batches in one matmul.  The Wo column block
    # (lanes 3D:4D) rides along for free inside the padded MXU pass; its result
    # is never read.  Scale 1/sqrt(DH) is already folded into Wq / bq.
    proj = jnp.dot(x.astype(bf16), wslab_ref[...],
                   preferred_element_type=jnp.float32) + bslab_ref[0:1, :]   # (B*L, 4D)
    proj_bf = proj.astype(bf16)              # single bf16 pack; k/v sliced from it

    ctx_rows = []
    for b in range(B):                       # B=2, statically unrolled
        r0, r1 = b * L, (b + 1) * L
        q_b = proj[r0:r1, 0:D]               # (L, D) f32 (pre-scaled)
        k_b = proj_bf[r0:r1, D:2 * D]        # (L, D) bf16
        v_b = proj_bf[r0:r1, 2 * D:3 * D]    # (L, D) bf16

        # Heads flattened onto the sublane axis: row r = h*L + i is query i
        # restricted to head-h lanes, so one dense matmul gives all head scores.
        qf = (jnp.tile(q_b, (H, 1)) * hmask).astype(bf16)                    # (H*L, D)

        # scores: contract on the last dim of both operands (q . k per key row)
        s = jax.lax.dot_general(qf, k_b, (((1,), (1,)), ((), ())),
                                preferred_element_type=jnp.float32)          # (H*L, L)
        s = s + amask_ref[b:b + 1, :]        # additive key mask, broadcast over rows

        # softmax over keys (each row = one (head, query) pair), exact divide, f32
        m = jnp.max(s, axis=-1, keepdims=True)
        e = jnp.exp(s - m)
        p = e / jnp.sum(e, axis=-1, keepdims=True)                           # (H*L, L)
        # NOTE: the reference multiplies probs by tmp_mask along the query dim;
        # it is redundant here because the final `* tq` zeroes those rows anyway.

        c = jnp.dot(p.astype(bf16), v_b, preferred_element_type=jnp.float32)  # (H*L, D)
        cm = c * hmask                        # keep only head-h lanes of row-block h
        ctx_b = cm[0:L]
        for h in range(1, H):                 # static unrolled sublane-slice adds
            ctx_b = ctx_b + cm[h * L:(h + 1) * L]                            # (L, D)
        ctx_rows.append(ctx_b)

    ctx = jnp.concatenate(ctx_rows, axis=0)   # (B*L, D)

    # BertAttOutput: dense -> (dropout = id) -> LayerNorm(dense + input) -> gelu
    wo = wslab_ref[:, 3 * D:4 * D]            # (D, D) bf16
    bo = bslab_ref[0:1, 3 * D:4 * D]          # (1, D) f32
    gamma = bslab_ref[1:2, 0:D]               # (1, D) f32
    beta = bslab_ref[1:2, D:2 * D]            # (1, D) f32

    dense = jnp.dot(ctx.astype(bf16), wo, preferred_element_type=jnp.float32) + bo
    y = dense + x
    mu = jnp.mean(y, axis=-1, keepdims=True)
    var = jnp.mean((y - mu) ** 2, axis=-1, keepdims=True)
    ln = (y - mu) * jax.lax.rsqrt(var + LN_EPS) * gamma + beta
    act = _gelu(ln)

    # final: attention_output * tmp_mask.unsqueeze(2) -- single dense store
    out_ref[...] = act * tq_ref[...]


def prepare_params(params):
    """One-time host-side param prep: fold the attention scale into Wq/bq, fuse
    all weights into one bf16 slab and all 1-D params into one f32 slab, and
    build the per-head lane mask."""
    wq, bq, wk, bk, wv, bv, wo, bo, gamma, beta = params
    scale = 1.0 / math.sqrt(DH)
    wslab = jnp.concatenate([wq * scale, wk, wv, wo], axis=1).astype(jnp.bfloat16)   # (D, 4D)
    brow = jnp.concatenate([bq * scale, bk, bv, bo], axis=1).astype(jnp.float32)     # (1, 4D)
    lnrow = jnp.concatenate([gamma, beta, jnp.zeros((1, 2 * D), jnp.float32)], axis=1)  # (1, 4D)
    bslab = jnp.concatenate([brow, lnrow], axis=0)                                   # (2, 4D)

    lane_head = jnp.arange(D, dtype=jnp.int32) // DH                       # (D,)
    row_head = jnp.arange(H * L, dtype=jnp.int32) // L                     # (H*L,)
    hmask = (row_head[:, None] == lane_head[None, :]).astype(jnp.float32)  # (H*L, D)
    return (hmask, wslab, bslab)


def bert_selfatt_layer(x, attention_mask, tmp_mask, prepped):
    """x: (B, L, D); attention_mask: (B, 1, 1, L) additive; tmp_mask: (B, L) 0/1."""
    hmask, wslab, bslab = prepped
    x2 = x.reshape(B * L, D).astype(jnp.float32)
    amask = attention_mask.reshape(B, L).astype(jnp.float32)
    tq = tmp_mask.reshape(B * L, 1).astype(jnp.float32)

    # No grid: single kernel invocation, whole arrays resident in VMEM
    # (a few KiB total), one prologue/epilogue, one dense output store.
    out = pl.pallas_call(
        bert_selfatt_kernel,
        out_shape=jax.ShapeDtypeStruct((B * L, D), jnp.float32),
    )(x2, amask, tq, hmask, wslab, bslab)
    return out.reshape(B, L, D)


def reference(x, attention_mask, tmp_mask, params):
    """Pure-JAX re-implementation of the PyTorch forward (dropout=0)."""
    wq, bq, wk, bk, wv, bv, wo, bo, gamma, beta = params
    q = x @ wq + bq
    k = x @ wk + bk
    v = x @ wv + bv

    def split(t):  # (B, L, D) -> (B, H, L, DH)
        return t.reshape(B, L, H, DH).transpose(0, 2, 1, 3)

    qh, kh, vh = split(q), split(k), split(v)
    scores = jnp.einsum('bhqd,bhkd->bhqk', qh, kh) / math.sqrt(DH)
    scores = scores + attention_mask                       # (B,1,1,L) broadcast
    probs = jax.nn.softmax(scores, axis=-1)
    probs = probs * tmp_mask[:, None, :, None]             # unsqueeze(1).unsqueeze(3)
    ctx = jnp.einsum('bhqk,bhkd->bhqd', probs, vh)
    ctx = ctx.transpose(0, 2, 1, 3).reshape(B, L, D)

    dense = ctx @ wo + bo
    y = dense + x
    mu = jnp.mean(y, axis=-1, keepdims=True)
    var = jnp.mean((y - mu) ** 2, axis=-1, keepdims=True)
    ln = (y - mu) / jnp.sqrt(var + LN_EPS) * gamma.reshape(D) + beta.reshape(D)
    act = ln * 0.5 * (1.0 + jax.lax.erf(ln / math.sqrt(2.0)))
    return act * tmp_mask[:, :, None]


def init_params(key):
    ks = jax.random.split(key, 5)
    s = 0.02
    wq = s * jax.random.normal(ks[0], (D, D), jnp.float32)
    wk = s * jax.random.normal(ks[1], (D, D), jnp.float32)
    wv = s * jax.random.normal(ks[2], (D, D), jnp.float32)
    wo = s * jax.random.normal(ks[3], (D, D), jnp.float32)
    bq = jnp.zeros((1, D), jnp.float32)
    bk = jnp.full((1, D), 0.01, jnp.float32)
    bv = jnp.full((1, D), -0.01, jnp.float32)
    bo = jnp.full((1, D), 0.02, jnp.float32)
    gamma = jnp.ones((1, D), jnp.float32)
    beta = jnp.zeros((1, D), jnp.float32)
    return (wq, bq, wk, bk, wv, bv, wo, bo, gamma, beta)


if __name__ == "__main__":
    key = jax.random.PRNGKey(0)
    kx, km, kp = jax.random.split(key, 3)

    x = jax.random.normal(kx, (B, L, D), jnp.float32)
    # additive attention mask: 0 for attended positions, -10000 for padded keys
    key_valid = (jax.random.uniform(km, (B, L)) > 0.2).astype(jnp.float32)
    attention_mask = (1.0 - key_valid)[:, None, None, :] * -10000.0   # (B,1,1,L)
    tmp_mask = key_valid                                              # (B, L) 0/1

    params = init_params(kp)
    prepped = prepare_params(params)

    out = bert_selfatt_layer(x, attention_mask, tmp_mask, prepped)
    out = jax.block_until_ready(out)

    ref = reference(x, attention_mask, tmp_mask, params)
    assert out.shape == (B, L, D)
    # tolerance absorbs bf16 matmul operands (f32 accumulation, exact softmax divide)
    assert jnp.allclose(out, ref, rtol=2e-2, atol=2e-2), "mismatch vs JAX reference"

    print("KERNEL_OK")
</pallas_src>

<mosaic_0001>
module attributes {stable_mosaic.version = 11 : i64} {
  func.func @bert_selfatt_kernel(%arg0: memref<16x32xf32, #tpu.memory_space<vmem>>, %arg1: memref<2x8xf32, #tpu.memory_space<vmem>>, %arg2: memref<16x1xf32, #tpu.memory_space<vmem>>, %arg3: memref<32x32xf32, #tpu.memory_space<vmem>>, %arg4: memref<32x128xbf16, #tpu.memory_space<vmem>>, %arg5: memref<2x128xf32, #tpu.memory_space<vmem>>, %arg6: memref<16x32xf32, #tpu.memory_space<vmem>>) attributes {dimension_semantics = [], scalar_prefetch = 0 : i64, scratch_operands = 0 : i64, tpu.core_type = #tpu.core_type<tc>} {
    %c0 = arith.constant 0 : index
    %c0_0 = arith.constant 0 : index
    %0 = vector.load %arg0[%c0, %c0_0] : memref<16x32xf32, #tpu.memory_space<vmem>>, vector<16x32xf32>
    %c0_1 = arith.constant 0 : index
    %c0_2 = arith.constant 0 : index
    %1 = vector.load %arg3[%c0_1, %c0_2] : memref<32x32xf32, #tpu.memory_space<vmem>>, vector<32x32xf32>
    %2 = arith.truncf %0 : vector<16x32xf32> to vector<16x32xbf16>
    %c0_3 = arith.constant 0 : index
    %c0_4 = arith.constant 0 : index
    %3 = vector.load %arg4[%c0_3, %c0_4] : memref<32x128xbf16, #tpu.memory_space<vmem>>, vector<32x128xbf16>
    %cst = arith.constant dense<0.000000e+00> : vector<16x128xf32>
    %4 = tpu.matmul %2, %3, %cst {dimension_numbers = #tpu.dot_dimension_numbers<[1], [0], [0], [1], [0, 0, 1, 1], [], []>} : vector<16x32xbf16>, vector<32x128xbf16>, vector<16x128xf32> -> vector<16x128xf32>
    %c0_5 = arith.constant 0 : index
    %c0_6 = arith.constant 0 : index
    %5 = vector.load %arg5[%c0_5, %c0_6] : memref<2x128xf32, #tpu.memory_space<vmem>>, vector<1x128xf32>
    %6 = vector.broadcast %5 : vector<1x128xf32> to vector<16x128xf32>
    %7 = arith.addf %4, %6 : vector<16x128xf32>
    %8 = arith.truncf %7 : vector<16x128xf32> to vector<16x128xbf16>
    %9 = vector.extract_strided_slice %7 {offsets = [0, 0], sizes = [8, 32], strides = [1, 1]} : vector<16x128xf32> to vector<8x32xf32>
    %10 = vector.extract_strided_slice %8 {offsets = [0, 32], sizes = [8, 32], strides = [1, 1]} : vector<16x128xbf16> to vector<8x32xbf16>
    %11 = vector.extract_strided_slice %8 {offsets = [0, 64], sizes = [8, 32], strides = [1, 1]} : vector<16x128xbf16> to vector<8x32xbf16>
    %12 = tpu.concatenate %9, %9, %9, %9 in 0 : vector<8x32xf32>, vector<8x32xf32>, vector<8x32xf32>, vector<8x32xf32> -> vector<32x32xf32>
    %13 = arith.mulf %12, %1 : vector<32x32xf32>
    %14 = arith.truncf %13 : vector<32x32xf32> to vector<32x32xbf16>
    %cst_7 = arith.constant dense<0.000000e+00> : vector<32x8xf32>
    %15 = tpu.matmul %14, %10, %cst_7 {dimension_numbers = #tpu.dot_dimension_numbers<[1], [1], [0], [0], [0, 0, 1, 0], [], []>} : vector<32x32xbf16>, vector<8x32xbf16>, vector<32x8xf32> -> vector<32x8xf32>
    %c0_8 = arith.constant 0 : index
    %c0_9 = arith.constant 0 : index
    %16 = vector.load %arg1[%c0_8, %c0_9] : memref<2x8xf32, #tpu.memory_space<vmem>>, vector<1x8xf32>
    %17 = vector.broadcast %16 : vector<1x8xf32> to vector<32x8xf32>
    %18 = arith.addf %15, %17 : vector<32x8xf32>
    %cst_10 = arith.constant dense<0xFF800000> : vector<32xf32>
    %19 = vector.multi_reduction <maximumf>, %18, %cst_10 [1] : vector<32x8xf32> to vector<32xf32>
    %20 = vector.shape_cast %19 : vector<32xf32> to vector<32x1xf32>
    %21 = vector.broadcast %20 : vector<32x1xf32> to vector<32x8xf32>
    %22 = arith.subf %18, %21 : vector<32x8xf32>
    %23 = math.exp %22 : vector<32x8xf32>
    %cst_11 = arith.constant dense<0.000000e+00> : vector<32xf32>
    %24 = vector.multi_reduction <add>, %23, %cst_11 [1] : vector<32x8xf32> to vector<32xf32>
    %25 = vector.shape_cast %24 : vector<32xf32> to vector<32x1xf32>
    %26 = vector.broadcast %25 : vector<32x1xf32> to vector<32x8xf32>
    %27 = arith.divf %23, %26 : vector<32x8xf32>
    %28 = arith.truncf %27 : vector<32x8xf32> to vector<32x8xbf16>
    %cst_12 = arith.constant dense<0.000000e+00> : vector<32x32xf32>
    %29 = tpu.matmul %28, %11, %cst_12 {dimension_numbers = #tpu.dot_dimension_numbers<[1], [0], [0], [1], [0, 0, 1, 1], [], []>} : vector<32x8xbf16>, vector<8x32xbf16>, vector<32x32xf32> -> vector<32x32xf32>
    %30 = arith.mulf %29, %1 : vector<32x32xf32>
    %31 = vector.extract_strided_slice %30 {offsets = [0, 0], sizes = [8, 32], strides = [1, 1]} : vector<32x32xf32> to vector<8x32xf32>
    %32 = vector.extract_strided_slice %30 {offsets = [8, 0], sizes = [8, 32], strides = [1, 1]} : vector<32x32xf32> to vector<8x32xf32>
    %33 = arith.addf %31, %32 : vector<8x32xf32>
    %34 = vector.extract_strided_slice %30 {offsets = [16, 0], sizes = [8, 32], strides = [1, 1]} : vector<32x32xf32> to vector<8x32xf32>
    %35 = arith.addf %33, %34 : vector<8x32xf32>
    %36 = vector.extract_strided_slice %30 {offsets = [24, 0], sizes = [8, 32], strides = [1, 1]} : vector<32x32xf32> to vector<8x32xf32>
    %37 = arith.addf %35, %36 : vector<8x32xf32>
    %38 = vector.extract_strided_slice %7 {offsets = [8, 0], sizes = [8, 32], strides = [1, 1]} : vector<16x128xf32> to vector<8x32xf32>
    %39 = vector.extract_strided_slice %8 {offsets = [8, 32], sizes = [8, 32], strides = [1, 1]} : vector<16x128xbf16> to vector<8x32xbf16>
    %40 = vector.extract_strided_slice %8 {offsets = [8, 64], sizes = [8, 32], strides = [1, 1]} : vector<16x128xbf16> to vector<8x32xbf16>
    %41 = tpu.concatenate %38, %38, %38, %38 in 0 : vector<8x32xf32>, vector<8x32xf32>, vector<8x32xf32>, vector<8x32xf32> -> vector<32x32xf32>
    %42 = arith.mulf %41, %1 : vector<32x32xf32>
    %43 = arith.truncf %42 : vector<32x32xf32> to vector<32x32xbf16>
    %cst_13 = arith.constant dense<0.000000e+00> : vector<32x8xf32>
    %44 = tpu.matmul %43, %39, %cst_13 {dimension_numbers = #tpu.dot_dimension_numbers<[1], [1], [0], [0], [0, 0, 1, 0], [], []>} : vector<32x32xbf16>, vector<8x32xbf16>, vector<32x8xf32> -> vector<32x8xf32>
    %c1 = arith.constant 1 : index
    %c0_14 = arith.constant 0 : index
    %45 = vector.load %arg1[%c1, %c0_14] : memref<2x8xf32, #tpu.memory_space<vmem>>, vector<1x8xf32>
    %46 = vector.broadcast %45 : vector<1x8xf32> to vector<32x8xf32>
    %47 = arith.addf %44, %46 : vector<32x8xf32>
    %cst_15 = arith.constant dense<0xFF800000> : vector<32xf32>
    %48 = vector.multi_reduction <maximumf>, %47, %cst_15 [1] : vector<32x8xf32> to vector<32xf32>
    %49 = vector.shape_cast %48 : vector<32xf32> to vector<32x1xf32>
    %50 = vector.broadcast %49 : vector<32x1xf32> to vector<32x8xf32>
    %51 = arith.subf %47, %50 : vector<32x8xf32>
    %52 = math.exp %51 : vector<32x8xf32>
    %cst_16 = arith.constant dense<0.000000e+00> : vector<32xf32>
    %53 = vector.multi_reduction <add>, %52, %cst_16 [1] : vector<32x8xf32> to vector<32xf32>
    %54 = vector.shape_cast %53 : vector<32xf32> to vector<32x1xf32>
    %55 = vector.broadcast %54 : vector<32x1xf32> to vector<32x8xf32>
    %56 = arith.divf %52, %55 : vector<32x8xf32>
    %57 = arith.truncf %56 : vector<32x8xf32> to vector<32x8xbf16>
    %cst_17 = arith.constant dense<0.000000e+00> : vector<32x32xf32>
    %58 = tpu.matmul %57, %40, %cst_17 {dimension_numbers = #tpu.dot_dimension_numbers<[1], [0], [0], [1], [0, 0, 1, 1], [], []>} : vector<32x8xbf16>, vector<8x32xbf16>, vector<32x32xf32> -> vector<32x32xf32>
    %59 = arith.mulf %58, %1 : vector<32x32xf32>
    %60 = vector.extract_strided_slice %59 {offsets = [0, 0], sizes = [8, 32], strides = [1, 1]} : vector<32x32xf32> to vector<8x32xf32>
    %61 = vector.extract_strided_slice %59 {offsets = [8, 0], sizes = [8, 32], strides = [1, 1]} : vector<32x32xf32> to vector<8x32xf32>
    %62 = arith.addf %60, %61 : vector<8x32xf32>
    %63 = vector.extract_strided_slice %59 {offsets = [16, 0], sizes = [8, 32], strides = [1, 1]} : vector<32x32xf32> to vector<8x32xf32>
    %64 = arith.addf %62, %63 : vector<8x32xf32>
    %65 = vector.extract_strided_slice %59 {offsets = [24, 0], sizes = [8, 32], strides = [1, 1]} : vector<32x32xf32> to vector<8x32xf32>
    %66 = arith.addf %64, %65 : vector<8x32xf32>
    %67 = tpu.concatenate %37, %66 in 0 : vector<8x32xf32>, vector<8x32xf32> -> vector<16x32xf32>
    %c0_18 = arith.constant 0 : index
    %c96 = arith.constant 96 : index
    %68 = vector.load %arg4[%c0_18, %c96] : memref<32x128xbf16, #tpu.memory_space<vmem>>, vector<32x32xbf16>
    %c0_19 = arith.constant 0 : index
    %c96_20 = arith.constant 96 : index
    %69 = vector.load %arg5[%c0_19, %c96_20] : memref<2x128xf32, #tpu.memory_space<vmem>>, vector<1x32xf32>
    %c1_21 = arith.constant 1 : index
    %c0_22 = arith.constant 0 : index
    %70 = vector.load %arg5[%c1_21, %c0_22] : memref<2x128xf32, #tpu.memory_space<vmem>>, vector<1x32xf32>
    %c1_23 = arith.constant 1 : index
    %c32 = arith.constant 32 : index
    %71 = vector.load %arg5[%c1_23, %c32] : memref<2x128xf32, #tpu.memory_space<vmem>>, vector<1x32xf32>
    %72 = arith.truncf %67 : vector<16x32xf32> to vector<16x32xbf16>
    %cst_24 = arith.constant dense<0.000000e+00> : vector<16x32xf32>
    %73 = tpu.matmul %72, %68, %cst_24 {dimension_numbers = #tpu.dot_dimension_numbers<[1], [0], [0], [1], [0, 0, 1, 1], [], []>} : vector<16x32xbf16>, vector<32x32xbf16>, vector<16x32xf32> -> vector<16x32xf32>
    %74 = vector.broadcast %69 : vector<1x32xf32> to vector<16x32xf32>
    %75 = arith.addf %73, %74 : vector<16x32xf32>
    %76 = arith.addf %75, %0 : vector<16x32xf32>
    %cst_25 = arith.constant dense<0.000000e+00> : vector<16xf32>
    %77 = vector.multi_reduction <add>, %76, %cst_25 [1] : vector<16x32xf32> to vector<16xf32>
    %78 = vector.shape_cast %77 : vector<16xf32> to vector<16x1xf32>
    %cst_26 = arith.constant 3.200000e+01 : f32
    %79 = vector.broadcast %cst_26 : f32 to vector<16x1xf32>
    %80 = arith.divf %78, %79 : vector<16x1xf32>
    %81 = vector.broadcast %80 : vector<16x1xf32> to vector<16x32xf32>
    %82 = arith.subf %76, %81 : vector<16x32xf32>
    %83 = arith.mulf %82, %82 : vector<16x32xf32>
    %cst_27 = arith.constant dense<0.000000e+00> : vector<16xf32>
    %84 = vector.multi_reduction <add>, %83, %cst_27 [1] : vector<16x32xf32> to vector<16xf32>
    %85 = vector.shape_cast %84 : vector<16xf32> to vector<16x1xf32>
    %cst_28 = arith.constant 3.200000e+01 : f32
    %86 = vector.broadcast %cst_28 : f32 to vector<16x1xf32>
    %87 = arith.divf %85, %86 : vector<16x1xf32>
    %88 = vector.broadcast %80 : vector<16x1xf32> to vector<16x32xf32>
    %89 = arith.subf %76, %88 : vector<16x32xf32>
    %cst_29 = arith.constant 9.99999996E-13 : f32
    %90 = vector.broadcast %cst_29 : f32 to vector<16x1xf32>
    %91 = arith.addf %87, %90 : vector<16x1xf32>
    %92 = math.rsqrt %91 : vector<16x1xf32>
    %93 = vector.broadcast %92 : vector<16x1xf32> to vector<16x32xf32>
    %94 = arith.mulf %89, %93 : vector<16x32xf32>
    %95 = vector.broadcast %70 : vector<1x32xf32> to vector<16x32xf32>
    %96 = arith.mulf %94, %95 : vector<16x32xf32>
    %97 = vector.broadcast %71 : vector<1x32xf32> to vector<16x32xf32>
    %98 = arith.addf %96, %97 : vector<16x32xf32>
    %cst_30 = arith.constant 5.000000e-01 : f32
    %99 = vector.broadcast %cst_30 : f32 to vector<16x32xf32>
    %100 = arith.mulf %98, %99 : vector<16x32xf32>
    %cst_31 = arith.constant 1.41421354 : f32
    %101 = vector.broadcast %cst_31 : f32 to vector<16x32xf32>
    %102 = arith.divf %98, %101 : vector<16x32xf32>
    %103 = math.erf %102 : vector<16x32xf32>
    %cst_32 = arith.constant 1.000000e+00 : f32
    %104 = vector.broadcast %cst_32 : f32 to vector<16x32xf32>
    %105 = arith.addf %104, %103 : vector<16x32xf32>
    %106 = arith.mulf %100, %105 : vector<16x32xf32>
    %c0_33 = arith.constant 0 : index
    %c0_34 = arith.constant 0 : index
    %107 = vector.load %arg2[%c0_33, %c0_34] : memref<16x1xf32, #tpu.memory_space<vmem>>, vector<16x1xf32>
    %108 = vector.broadcast %107 : vector<16x1xf32> to vector<16x32xf32>
    %109 = arith.mulf %106, %108 : vector<16x32xf32>
    %c0_35 = arith.constant 0 : index
    %c0_36 = arith.constant 0 : index
    %110 = vector.load %arg6[%c0_35, %c0_36] : memref<16x32xf32, #tpu.memory_space<vmem>>, vector<16x32xf32>
    tpu.vector_store %arg6[%c0_35, %c0_36], %109 {strides = array<i32>} : memref<16x32xf32, #tpu.memory_space<vmem>>, vector<16x32xf32>,
    return
  }
}

</mosaic_0001>

<llo_original>
// kernel: tpu_custom_call.1
$region0: #{tpu_custom_call.1}
  #allocation0 [shape = 'u32[]', space=smem, size = 0x4, offset = 0x4, fixed_abs, tag = 'smem constant byte address 0x4 - core index']
  #allocation1 [shape = 'u32[144,128]{1,0:T(1,128)}', space=vmem, size = 0x12000, scoped, tag = 'internal scratch']
  %s0 = inlined_call_operand.vmem [shape: f32[16,32], index: 0, kind: input, shape index: {}]
  %s1 = inlined_call_operand.hbm [shape: f32[2,8], index: 1, kind: input, shape index: {}]
  %s2 = inlined_call_operand.vmem [shape: f32[16,1], index: 2, kind: input, shape index: {}]
  %s3 = inlined_call_operand.hbm [shape: f32[32,32], index: 3, kind: input, shape index: {}]
  %s4 = inlined_call_operand.vmem [shape: bf16[32,128], index: 4, kind: input, shape index: {}]
  %s5 = inlined_call_operand.vmem [shape: f32[2,128], index: 5, kind: input, shape index: {}]
  %s6 = inlined_call_operand.hbm [shape: f32[16,32], index: 6, kind: output, shape index: {}]
  %s7 = sld [smem:[#allocation0]]
  $region42: #{tpu_custom_call.1} parent=0
    _
  %s9 = ssub.s32 1, %s7
  %s10 = scalar_select 0, %s9, %s7
  $region1: #{tpu_custom_call.1} parent=0
    #allocation2 [shape = 'u8[1024]{0}', space=vmem, size = 0x400, scoped, tag = 'input window, operand 1, single buffered']
    #allocation3 [shape = 's32[1]{0}', space=sflag, size = 0x4, scoped, tag = 'scoped memory for tpu_custom_call.1']
    #allocation4 [shape = 's32[1]{0}', space=sflag, size = 0x4, scoped, tag = 'scoped memory for tpu_custom_call.1']
    #allocation5 [shape = 'u8[16384]{0}', space=vmem, size = 0x4000, scoped, tag = 'input window, operand 3, single buffered']
    #allocation6 [shape = 's32[1]{0}', space=sflag, size = 0x4, scoped, tag = 'scoped memory for tpu_custom_call.1']
    #allocation7 [shape = 'u8[8192]{0}', space=vmem, size = 0x2000, scoped, tag = 'output window, operand 0, single buffered']
    %11 = vsyncpa [#allocation3], 0
    %12 = vsyncpa [#allocation6], 0
    %13 = vsyncpa [#allocation4], 0
    // Predicated region
    $region2: #{tpu_custom_call.1} parent=1 // pred_check
      _
    $region3: #{tpu_custom_call.1} parent=1 // pred_check_branch
      %15 = sbr.rel (0) target = $region5
    $region4: #{tpu_custom_call.1} parent=1 // pred_region
      _
    $region5: #{tpu_custom_call.1} parent=1 // pred_fallthru
      _
    // Predicated region
    $region6: #{tpu_custom_call.1} parent=1 // pred_check
      _
    $region7: #{tpu_custom_call.1} parent=1 // pred_check_branch
      %17 = sbr.rel (0) target = $region9
    $region8: #{tpu_custom_call.1} parent=1 // pred_region
      %s19 = ssub.s32 32, 32
      %20 = vsyncadd [#allocation3], %s19
      %s22 = sshll.u32 [#allocation2], 4
      %s23 = int_to_ptr.vmem [resolvable:$true] %s22
      %25 = dma.hbm_to_vmem [thread:$0]  %s1, 32, %s23, [#allocation3]
    $region9: #{tpu_custom_call.1} parent=1 // pred_fallthru
      _
    // Predicated region
    $region10: #{tpu_custom_call.1} parent=1 // pred_check
      _
    $region11: #{tpu_custom_call.1} parent=1 // pred_check_branch
      %27 = sbr.rel (0) target = $region13
    $region12: #{tpu_custom_call.1} parent=1 // pred_region
      _
    $region13: #{tpu_custom_call.1} parent=1 // pred_fallthru
      _
    // Predicated region
    $region14: #{tpu_custom_call.1} parent=1 // pred_check
      _
    $region15: #{tpu_custom_call.1} parent=1 // pred_check_branch
      %29 = sbr.rel (0) target = $region17
    $region16: #{tpu_custom_call.1} parent=1 // pred_region
      %s31 = ssub.s32 512, 512
      %32 = vsyncadd [#allocation6], %s31
      %s33 = sshll.u32 [#allocation5], 4
      %s34 = int_to_ptr.vmem [resolvable:$true] %s33
      %39 = dma.hbm_to_vmem [thread:$0]  %s3, 512, %s34, [#allocation6], 128, 128, 8
    $region17: #{tpu_custom_call.1} parent=1 // pred_fallthru
      _
    // Predicated region
    $region18: #{tpu_custom_call.1} parent=1 // pred_check
      _
    $region19: #{tpu_custom_call.1} parent=1 // pred_check_branch
      %41 = sbr.rel (0) target = $region21
    $region20: #{tpu_custom_call.1} parent=1 // pred_region
      _
    $region21: #{tpu_custom_call.1} parent=1 // pred_fallthru
      _
    // Predicated region
    $region22: #{tpu_custom_call.1} parent=1 // pred_check
      _
    $region23: #{tpu_custom_call.1} parent=1 // pred_check_branch
      %43 = sbr.rel (0) target = $region25
    $region24: #{tpu_custom_call.1} parent=1 // pred_region
      _
    $region25: #{tpu_custom_call.1} parent=1 // pred_fallthru
      _
    // Predicated region
    $region26: #{tpu_custom_call.1} parent=1 // pred_check
      _
    $region27: #{tpu_custom_call.1} parent=1 // pred_check_branch
      %45 = sbr.rel (0) target = $region29
    $region28: #{tpu_custom_call.1} parent=1 // pred_region
      %46 = dma.done [#allocation3], 32
    $region29: #{tpu_custom_call.1} parent=1 // pred_fallthru
      _
    // Predicated region
    $region30: #{tpu_custom_call.1} parent=1 // pred_check
      _
    $region31: #{tpu_custom_call.1} parent=1 // pred_check_branch
      %48 = sbr.rel (0) target = $region33
    $region32: #{tpu_custom_call.1} parent=1 // pred_region
      %49 = dma.done [#allocation6], 512
    $region33: #{tpu_custom_call.1} parent=1 // pred_fallthru
      _
    %v51 = vld [vmem:[%s0] sm:$0xff]
    %v52 = vld [vmem:[%s0 + $0x8] sm:$0xff]
    %v53 = vld [vmem:[#allocation5] sm:$0xff]
    %v54 = vld [vmem:[#allocation5 + $0x8] sm:$0xff]
    %v55 = vld [vmem:[#allocation5 + $0x10] sm:$0xff]
    %v56 = vld [vmem:[#allocation5 + $0x18] sm:$0xff]
    %v57 = vpack.c.bf16 %v52, %v51
    %v58 = vld [vmem:[%s4] sm:$0xf]
    %v59 = vld [vmem:[%s4 + $0x4] sm:$0xf]
    %v60 = vld [vmem:[%s4 + $0x8] sm:$0xf]
    %v61 = vld [vmem:[%s4 + $0xc] sm:$0xf]
    %v62 = vld [vmem:[%s5] sm:$0x1]
    %v63 = vlaneseq
    %v64 = vshrl.u32 %v63, 7
    %v65 = vsub.s32 0, %v64
    %v66 = vrot.slane %v62, %v65
    %v71 = vunpack.c.l.b16 %v58
    %v72 = vunpack.c.l.b16 %v59
    %v73 = vunpack.c.l.b16 %v60
    %v74 = vunpack.c.l.b16 %v61
    %v75 = vpack.c.b16 %v72, %v71
    %v76 = vpack.c.b16 %v74, %v73
    %vm79 = vcmask 261120
    %v81 = vsel %vm79, %v57, 0
    %83 = vmatprep.subr.bf16.mxu0 0
    %84 = vmatpush1.bf16.msra.mxu0 %v75
    %85 = vmatprep.subr.bf16.mxu0 0
    %86 = vmatpush1.bf16.msra.mxu0 %v76
    %87 = vmatprep.subr.bf16.mxu0 0
    %88 = vmatpush1.bf16.msra.mxu0 0
    %89 = vmatprep.subr.bf16.mxu0 0
    %90 = vmatpush1.bf16.msra.mxu0 0
    %91 = vmatprep.subr.bf16.mxu0 0
    %92 = vmatpush1.bf16.msra.mxu0 0
    %93 = vmatprep.subr.bf16.mxu0 0
    %94 = vmatpush1.bf16.msra.mxu0 0
    %95 = vmatprep.subr.bf16.mxu0 0
    %96 = vmatpush1.bf16.msra.mxu0 0
    %97 = vmatprep.subr.bf16.mxu0 0
    %98 = vmatpush1.bf16.msra.mxu0 0
    %99 = vmatprep.subr.bf16.mxu0 0
    %100 = vmatpush1.bf16.msra.mxu0 0
    %101 = vmatprep.subr.bf16.mxu0 0
    %102 = vmatpush1.bf16.msra.mxu0 0
    %103 = vmatprep.subr.bf16.mxu0 0
    %104 = vmatpush1.bf16.msra.mxu0 0
    %105 = vmatprep.subr.bf16.mxu0 0
    %106 = vmatpush1.bf16.msra.mxu0 0
    %107 = vmatprep.subr.bf16.mxu0 0
    %108 = vmatpush1.bf16.msra.mxu0 0
    %109 = vmatprep.subr.bf16.mxu0 0
    %110 = vmatpush1.bf16.msra.mxu0 0
    %111 = vmatprep.subr.bf16.mxu0 0
    %112 = vmatpush1.bf16.msra.mxu0 0
    %113 = vmatprep.subr.bf16.mxu0 0
    %114 = vmatpush1.bf16.msra.mxu0 0
    %115 = vmatprep.mubr.bf16.mxu0 0
    %116 = vmatmul.mubr.bf16.gmra.mrb[0].mxu0 %v81
    %v117 = vpop.f32.mrb[0].mxu0
    %v118 = vadd.f32 %v66, %v117
    %v119 = vpop.f32.mrb[0].mxu0
    %v120 = vpop.f32.mrb[0].mxu0
    %v121 = vadd.f32 %v66, %v120
    %v122 = vpop.f32.mrb[0].mxu0
    %123 = vdwg.mxu0
    %v124 = vpack.c.bf16 %v121, %v118
    %v125 = vmul.f32 %v118, %v53
    %v126 = vmul.f32 %v118, %v54
    %v127 = vmul.f32 %v118, %v55
    %v128 = vmul.f32 %v118, %v56
    %v129 = vpack.c.bf16 %v126, %v125
    %v130 = vpack.c.bf16 %v128, %v127
    %v131 = vld [vmem:[#allocation2] sm:$0x1]
    %v132 = vlaneseq
    %v133 = vshrl.u32 %v132, 7
    %v134 = vsub.s32 0, %v133
    %v135 = vrot.slane %v131, %v134
    %137 = vrot.lane.b32.xlu0 %v124, 96
    %v138 = vpop.permute.xlu0 %137
    %v140 = vsel %vm79, %v129, 0
    %v143 = vsel %vm79, %v130, 0
    %v146 = vsel %vm79, %v138, 0
    %148 = vmatprep.subr.bf16.mxu0 0
    %149 = vmatpush1.bf16.xpose.msra.mxu0 %v146
    %150 = vmatprep.subr.bf16.mxu0 0
    %151 = vmatpush1.bf16.xpose.msra.mxu0 0
    %152 = vmatprep.subr.bf16.mxu0 0
    %153 = vmatpush1.bf16.xpose.msra.mxu0 0
    %154 = vmatprep.subr.bf16.mxu0 0
    %155 = vmatpush1.bf16.xpose.msra.mxu0 0
    %156 = vmatprep.subr.bf16.mxu0 0
    %157 = vmatpush1.bf16.xpose.msra.mxu0 0
    %158 = vmatprep.subr.bf16.mxu0 0
    %159 = vmatpush1.bf16.xpose.msra.mxu0 0
    %160 = vmatprep.subr.bf16.mxu0 0
    %161 = vmatpush1.bf16.xpose.msra.mxu0 0
    %162 = vmatprep.subr.bf16.mxu0 0
    %163 = vmatpush1.bf16.xpose.msra.mxu0 0
    %164 = vmatprep.subr.bf16.mxu0 0
    %165 = vmatpush1.bf16.xpose.msra.mxu0 0
    %166 = vmatprep.subr.bf16.mxu0 0
    %167 = vmatpush1.bf16.xpose.msra.mxu0 0
    %168 = vmatprep.subr.bf16.mxu0 0
    %169 = vmatpush1.bf16.xpose.msra.mxu0 0
    %170 = vmatprep.subr.bf16.mxu0 0
    %171 = vmatpush1.bf16.xpose.msra.mxu0 0
    %172 = vmatprep.subr.bf16.mxu0 0
    %173 = vmatpush1.bf16.xpose.msra.mxu0 0
    %174 = vmatprep.subr.bf16.mxu0 0
    %175 = vmatpush1.bf16.xpose.msra.mxu0 0
    %176 = vmatprep.subr.bf16.mxu0 0
    %177 = vmatpush1.bf16.xpose.msra.mxu0 0
    %178 = vmatprep.subr.bf16.mxu0 0
    %179 = vmatpush1.bf16.xpose.msra.mxu0 0
    %180 = vmatprep.mubr.bf16.mxu0 0
    %181 = vmatmul.mubr.bf16.gmra.mrb[0].mxu0 %v140
    %v182 = vpop.f32.mrb[0].mxu0
    %v183 = vadd.f32 %v135, %v182
    %v184 = vpop.f32.mrb[0].mxu0
    %v185 = vpop.f32.mrb[0].mxu0
    %v186 = vadd.f32 %v135, %v185
    %v187 = vpop.f32.mrb[0].mxu0
    %188 = vmatprep.mubr.bf16.mxu0 0
    %189 = vmatmul.mubr.bf16.gmra.mrb[0].mxu0 %v143
    %v190 = vpop.f32.mrb[0].mxu0
    %v191 = vadd.f32 %v135, %v190
    %v192 = vpop.f32.mrb[0].mxu0
    %v193 = vpop.f32.mrb[0].mxu0
    %v194 = vadd.f32 %v135, %v193
    %v195 = vpop.f32.mrb[0].mxu0
    %196 = vdwg.mxu0
    %vm197 = vcmask 64512
    %v198 = vsel %vm197, %v183, -inf
    %199 = vmax.xlane.f32.xlu0 %v198
    %v200 = vpop.xlane.xlu0 %199
    %v201 = vsel %vm197, %v186, -inf
    %202 = vmax.xlane.f32.xlu0 %v201
    %v203 = vpop.xlane.xlu0 %202
    %v204 = vsel %vm197, %v191, -inf
    %205 = vmax.xlane.f32.xlu0 %v204
    %v206 = vpop.xlane.xlu0 %205
    %v207 = vsel %vm197, %v194, -inf
    %208 = vmax.xlane.f32.xlu0 %v207
    %v209 = vpop.xlane.xlu0 %208
    %v210 = vsub.f32 %v183, %v200
    %v211 = vsub.f32 %v186, %v203
    %v212 = vsub.f32 %v191, %v206
    %v213 = vsub.f32 %v194, %v209
    %v214 = vmul.f32 %v210, 1.442695
    %v215 = vpow.pop %v214
    %v216 = vmul.f32 %v211, 1.442695
    %v217 = vpow.pop %v216
    %v218 = vmul.f32 %v212, 1.442695
    %v219 = vpow.pop %v218
    %v220 = vmul.f32 %v213, 1.442695
    %v221 = vpow.pop %v220
    %v222 = vsel %vm197, %v215, 0.0
    %223 = vadd.xlane.f32.xlu0 %v222
    %v224 = vpop.xlane.xlu0 %223
    %v225 = vsel %vm197, %v217, 0.0
    %226 = vadd.xlane.f32.xlu0 %v225
    %v227 = vpop.xlane.xlu0 %226
    %v228 = vsel %vm197, %v219, 0.0
    %229 = vadd.xlane.f32.xlu0 %v228
    %v230 = vpop.xlane.xlu0 %229
    %v231 = vsel %vm197, %v221, 0.0
    %232 = vadd.xlane.f32.xlu0 %v231
    %v233 = vpop.xlane.xlu0 %232
    %v234 = vrcp.pop %v224
    %v235 = vmul.f32 %v215, %v234
    %v236 = vrcp.pop %v227
    %v237 = vmul.f32 %v217, %v236
    %v238 = vrcp.pop %v230
    %v239 = vmul.f32 %v219, %v238
    %v240 = vrcp.pop %v233
    %v241 = vmul.f32 %v221, %v240
    %v242 = vpack.c.bf16 %v237, %v235
    %v243 = vpack.c.bf16 %v241, %v239
    %244 = vrot.lane.b32.xlu0 %v124, 64
    %v245 = vpop.permute.xlu0 %244
    %v247 = vsel %vm197, %v242, 0
    %v250 = vsel %vm197, %v243, 0
    %vm252 = vcmask 1043456
    %v254 = vsel %vm252, %v245, 0
    %256 = vmatprep.subr.bf16.mxu0 0
    %257 = vmatpush1.bf16.msra.mxu0 %v254
    %258 = vmatprep.subr.bf16.mxu0 0
    %259 = vmatpush1.bf16.msra.mxu0 0
    %260 = vmatprep.subr.bf16.mxu0 0
    %261 = vmatpush1.bf16.msra.mxu0 0
    %262 = vmatprep.subr.bf16.mxu0 0
    %263 = vmatpush1.bf16.msra.mxu0 0
    %264 = vmatprep.subr.bf16.mxu0 0
    %265 = vmatpush1.bf16.msra.mxu0 0
    %266 = vmatprep.subr.bf16.mxu0 0
    %267 = vmatpush1.bf16.msra.mxu0 0
    %268 = vmatprep.subr.bf16.mxu0 0
    %269 = vmatpush1.bf16.msra.mxu0 0
    %270 = vmatprep.subr.bf16.mxu0 0
    %271 = vmatpush1.bf16.msra.mxu0 0
    %272 = vmatprep.subr.bf16.mxu0 0
    %273 = vmatpush1.bf16.msra.mxu0 0
    %274 = vmatprep.subr.bf16.mxu0 0
    %275 = vmatpush1.bf16.msra.mxu0 0
    %276 = vmatprep.subr.bf16.mxu0 0
    %277 = vmatpush1.bf16.msra.mxu0 0
    %278 = vmatprep.subr.bf16.mxu0 0
    %279 = vmatpush1.bf16.msra.mxu0 0
    %280 = vmatprep.subr.bf16.mxu0 0
    %281 = vmatpush1.bf16.msra.mxu0 0
    %282 = vmatprep.subr.bf16.mxu0 0
    %283 = vmatpush1.bf16.msra.mxu0 0
    %284 = vmatprep.subr.bf16.mxu0 0
    %285 = vmatpush1.bf16.msra.mxu0 0
    %286 = vmatprep.subr.bf16.mxu0 0
    %287 = vmatpush1.bf16.msra.mxu0 0
    %288 = vmatprep.mubr.bf16.mxu0 0
    %289 = vmatmul.mubr.bf16.gmra.mrb[0].mxu0 %v247
    %v290 = vpop.f32.mrb[0].mxu0
    %v291 = vadd.f32 0.0, %v290
    %v292 = vpop.f32.mrb[0].mxu0
    %v293 = vpop.f32.mrb[0].mxu0
    %v294 = vadd.f32 0.0, %v293
    %v295 = vpop.f32.mrb[0].mxu0
    %296 = vmatprep.mubr.bf16.mxu0 0
    %297 = vmatmul.mubr.bf16.gmra.mrb[0].mxu0 %v250
    %v298 = vpop.f32.mrb[0].mxu0
    %v299 = vadd.f32 0.0, %v298
    %v300 = vpop.f32.mrb[0].mxu0
    %v301 = vpop.f32.mrb[0].mxu0
    %v302 = vadd.f32 0.0, %v301
    %v303 = vpop.f32.mrb[0].mxu0
    %304 = vdwg.mxu0
    %v305 = vmul.f32 %v291, %v53
    %v306 = vmul.f32 %v294, %v54
    %v307 = vmul.f32 %v299, %v55
    %v308 = vmul.f32 %v302, %v56
    %v309 = vadd.f32 %v305, %v306
    %v310 = vadd.f32 %v309, %v307
    %v311 = vadd.f32 %v310, %v308
    %v312 = vmul.f32 %v121, %v53
    %v313 = vmul.f32 %v121, %v54
    %v314 = vmul.f32 %v121, %v55
    %v315 = vmul.f32 %v121, %v56
    %v316 = vpack.c.bf16 %v313, %v312
    %v317 = vpack.c.bf16 %v315, %v314
    %v318 = vld [vmem:[#allocation2 + $0x1] sm:$0x1]
    %v319 = vlaneseq
    %v320 = vshrl.u32 %v319, 7
    %v321 = vsub.s32 0, %v320
    %v322 = vrot.slane %v318, %v321
    %v323 = vrot.slane %v124, 4
    %324 = vrot.lane.b32.xlu0 %v323, 96
    %v325 = vpop.permute.xlu0 %324
    %v327 = vsel %vm79, %v316, 0
    %v330 = vsel %vm79, %v317, 0
    %v333 = vsel %vm79, %v325, 0
    %335 = vmatprep.subr.bf16.mxu0 0
    %336 = vmatpush1.bf16.xpose.msra.mxu0 %v333
    %337 = vmatprep.subr.bf16.mxu0 0
    %338 = vmatpush1.bf16.xpose.msra.mxu0 0
    %339 = vmatprep.subr.bf16.mxu0 0
    %340 = vmatpush1.bf16.xpose.msra.mxu0 0
    %341 = vmatprep.subr.bf16.mxu0 0
    %342 = vmatpush1.bf16.xpose.msra.mxu0 0
    %343 = vmatprep.subr.bf16.mxu0 0
    %344 = vmatpush1.bf16.xpose.msra.mxu0 0
    %345 = vmatprep.subr.bf16.mxu0 0
    %346 = vmatpush1.bf16.xpose.msra.mxu0 0
    %347 = vmatprep.subr.bf16.mxu0 0
    %348 = vmatpush1.bf16.xpose.msra.mxu0 0
    %349 = vmatprep.subr.bf16.mxu0 0
    %350 = vmatpush1.bf16.xpose.msra.mxu0 0
    %351 = vmatprep.subr.bf16.mxu0 0
    %352 = vmatpush1.bf16.xpose.msra.mxu0 0
    %353 = vmatprep.subr.bf16.mxu0 0
    %354 = vmatpush1.bf16.xpose.msra.mxu0 0
    %355 = vmatprep.subr.bf16.mxu0 0
    %356 = vmatpush1.bf16.xpose.msra.mxu0 0
    %357 = vmatprep.subr.bf16.mxu0 0
    %358 = vmatpush1.bf16.xpose.msra.mxu0 0
    %359 = vmatprep.subr.bf16.mxu0 0
    %360 = vmatpush1.bf16.xpose.msra.mxu0 0
    %361 = vmatprep.subr.bf16.mxu0 0
    %362 = vmatpush1.bf16.xpose.msra.mxu0 0
    %363 = vmatprep.subr.bf16.mxu0 0
    %364 = vmatpush1.bf16.xpose.msra.mxu0 0
    %365 = vmatprep.subr.bf16.mxu0 0
    %366 = vmatpush1.bf16.xpose.msra.mxu0 0
    %367 = vmatprep.mubr.bf16.mxu0 0
    %368 = vmatmul.mubr.bf16.gmra.mrb[0].mxu0 %v327
    %v369 = vpop.f32.mrb[0].mxu0
    %v370 = vadd.f32 %v322, %v369
    %v371 = vpop.f32.mrb[0].mxu0
    %v372 = vpop.f32.mrb[0].mxu0
    %v373 = vadd.f32 %v322, %v372
    %v374 = vpop.f32.mrb[0].mxu0
    %375 = vmatprep.mubr.bf16.mxu0 0
    %376 = vmatmul.mubr.bf16.gmra.mrb[0].mxu0 %v330
    %v377 = vpop.f32.mrb[0].mxu0
    %v378 = vadd.f32 %v322, %v377
    %v379 = vpop.f32.mrb[0].mxu0
    %v380 = vpop.f32.mrb[0].mxu0
    %v381 = vadd.f32 %v322, %v380
    %v382 = vpop.f32.mrb[0].mxu0
    %383 = vdwg.mxu0
    %v384 = vsel %vm197, %v370, -inf
    %385 = vmax.xlane.f32.xlu0 %v384
    %v386 = vpop.xlane.xlu0 %385
    %v387 = vsel %vm197, %v373, -inf
    %388 = vmax.xlane.f32.xlu0 %v387
    %v389 = vpop.xlane.xlu0 %388
    %v390 = vsel %vm197, %v378, -inf
    %391 = vmax.xlane.f32.xlu0 %v390
    %v392 = vpop.xlane.xlu0 %391
    %v393 = vsel %vm197, %v381, -inf
    %394 = vmax.xlane.f32.xlu0 %v393
    %v395 = vpop.xlane.xlu0 %394
    %v396 = vsub.f32 %v370, %v386
    %v397 = vsub.f32 %v373, %v389
    %v398 = vsub.f32 %v378, %v392
    %v399 = vsub.f32 %v381, %v395
    %v400 = vmul.f32 %v396, 1.442695
    %v401 = vpow.pop %v400
    %v402 = vmul.f32 %v397, 1.442695
    %v403 = vpow.pop %v402
    %v404 = vmul.f32 %v398, 1.442695
    %v405 = vpow.pop %v404
    %v406 = vmul.f32 %v399, 1.442695
    %v407 = vpow.pop %v406
    %v408 = vsel %vm197, %v401, 0.0
    %409 = vadd.xlane.f32.xlu0 %v408
    %v410 = vpop.xlane.xlu0 %409
    %v411 = vsel %vm197, %v403, 0.0
    %412 = vadd.xlane.f32.xlu0 %v411
    %v413 = vpop.xlane.xlu0 %412
    %v414 = vsel %vm197, %v405, 0.0
    %415 = vadd.xlane.f32.xlu0 %v414
    %v416 = vpop.xlane.xlu0 %415
    %v417 = vsel %vm197, %v407, 0.0
    %418 = vadd.xlane.f32.xlu0 %v417
    %v419 = vpop.xlane.xlu0 %418
    %v420 = vrcp.pop %v410
    %v421 = vmul.f32 %v401, %v420
    %v422 = vrcp.pop %v413
    %v423 = vmul.f32 %v403, %v422
    %v424 = vrcp.pop %v416
    %v425 = vmul.f32 %v405, %v424
    %v426 = vrcp.pop %v419
    %v427 = vmul.f32 %v407, %v426
    %v428 = vpack.c.bf16 %v423, %v421
    %v429 = vpack.c.bf16 %v427, %v425
    %430 = vrot.lane.b32.xlu0 %v323, 64
    %v431 = vpop.permute.xlu0 %430
    %v433 = vsel %vm197, %v428, 0
    %v436 = vsel %vm197, %v429, 0
    %v439 = vsel %vm252, %v431, 0
    %441 = vmatprep.subr.bf16.mxu0 0
    %442 = vmatpush1.bf16.msra.mxu0 %v439
    %443 = vmatprep.subr.bf16.mxu0 0
    %444 = vmatpush1.bf16.msra.mxu0 0
    %445 = vmatprep.subr.bf16.mxu0 0
    %446 = vmatpush1.bf16.msra.mxu0 0
    %447 = vmatprep.subr.bf16.mxu0 0
    %448 = vmatpush1.bf16.msra.mxu0 0
    %449 = vmatprep.subr.bf16.mxu0 0
    %450 = vmatpush1.bf16.msra.mxu0 0
    %451 = vmatprep.subr.bf16.mxu0 0
    %452 = vmatpush1.bf16.msra.mxu0 0
    %453 = vmatprep.subr.bf16.mxu0 0
    %454 = vmatpush1.bf16.msra.mxu0 0
    %455 = vmatprep.subr.bf16.mxu0 0
    %456 = vmatpush1.bf16.msra.mxu0 0
    %457 = vmatprep.subr.bf16.mxu0 0
    %458 = vmatpush1.bf16.msra.mxu0 0
    %459 = vmatprep.subr.bf16.mxu0 0
    %460 = vmatpush1.bf16.msra.mxu0 0
    %461 = vmatprep.subr.bf16.mxu0 0
    %462 = vmatpush1.bf16.msra.mxu0 0
    %463 = vmatprep.subr.bf16.mxu0 0
    %464 = vmatpush1.bf16.msra.mxu0 0
    %465 = vmatprep.subr.bf16.mxu0 0
    %466 = vmatpush1.bf16.msra.mxu0 0
    %467 = vmatprep.subr.bf16.mxu0 0
    %468 = vmatpush1.bf16.msra.mxu0 0
    %469 = vmatprep.subr.bf16.mxu0 0
    %470 = vmatpush1.bf16.msra.mxu0 0
    %471 = vmatprep.subr.bf16.mxu0 0
    %472 = vmatpush1.bf16.msra.mxu0 0
    %473 = vmatprep.mubr.bf16.mxu0 0
    %474 = vmatmul.mubr.bf16.gmra.mrb[0].mxu0 %v433
    %v475 = vpop.f32.mrb[0].mxu0
    %v476 = vadd.f32 0.0, %v475
    %v477 = vpop.f32.mrb[0].mxu0
    %v478 = vpop.f32.mrb[0].mxu0
    %v479 = vadd.f32 0.0, %v478
    %v480 = vpop.f32.mrb[0].mxu0
    %481 = vmatprep.mubr.bf16.mxu0 0
    %482 = vmatmul.mubr.bf16.gmra.mrb[0].mxu0 %v436
    %v483 = vpop.f32.mrb[0].mxu0
    %v484 = vadd.f32 0.0, %v483
    %v485 = vpop.f32.mrb[0].mxu0
    %v486 = vpop.f32.mrb[0].mxu0
    %v487 = vadd.f32 0.0, %v486
    %v488 = vpop.f32.mrb[0].mxu0
    %489 = vdwg.mxu0
    %v490 = vmul.f32 %v476, %v53
    %v491 = vmul.f32 %v479, %v54
    %v492 = vmul.f32 %v484, %v55
    %v493 = vmul.f32 %v487, %v56
    %v494 = vadd.f32 %v490, %v491
    %v495 = vadd.f32 %v494, %v492
    %v496 = vadd.f32 %v495, %v493
    %v497 = vld [vmem:[%s5 + $0x1] sm:$0x1]
    %v498 = vpack.c.bf16 %v496, %v311
    %499 = vrot.lane.b32.xlu0 %v75, 32
    %v500 = vpop.permute.xlu0 %499
    %501 = vrot.lane.b32.xlu0 %v76, 32
    %v502 = vpop.permute.xlu0 %501
    %506 = vrot.lane.b32.xlu0 %v66, 32
    %v507 = vpop.permute.xlu0 %506
    %v510 = vsel %vm79, %v498, 0
    %512 = vmatprep.subr.bf16.mxu0 0
    %513 = vmatpush1.bf16.msra.mxu0 %v500
    %514 = vmatprep.subr.bf16.mxu0 0
    %515 = vmatpush1.bf16.msra.mxu0 %v502
    %516 = vmatprep.subr.bf16.mxu0 0
    %517 = vmatpush1.bf16.msra.mxu0 0
    %518 = vmatprep.subr.bf16.mxu0 0
    %519 = vmatpush1.bf16.msra.mxu0 0
    %520 = vmatprep.subr.bf16.mxu0 0
    %521 = vmatpush1.bf16.msra.mxu0 0
    %522 = vmatprep.subr.bf16.mxu0 0
    %523 = vmatpush1.bf16.msra.mxu0 0
    %524 = vmatprep.subr.bf16.mxu0 0
    %525 = vmatpush1.bf16.msra.mxu0 0
    %526 = vmatprep.subr.bf16.mxu0 0
    %527 = vmatpush1.bf16.msra.mxu0 0
    %528 = vmatprep.subr.bf16.mxu0 0
    %529 = vmatpush1.bf16.msra.mxu0 0
    %530 = vmatprep.subr.bf16.mxu0 0
    %531 = vmatpush1.bf16.msra.mxu0 0
    %532 = vmatprep.subr.bf16.mxu0 0
    %533 = vmatpush1.bf16.msra.mxu0 0
    %534 = vmatprep.subr.bf16.mxu0 0
    %535 = vmatpush1.bf16.msra.mxu0 0
    %536 = vmatprep.subr.bf16.mxu0 0
    %537 = vmatpush1.bf16.msra.mxu0 0
    %538 = vmatprep.subr.bf16.mxu0 0
    %539 = vmatpush1.bf16.msra.mxu0 0
    %540 = vmatprep.subr.bf16.mxu0 0
    %541 = vmatpush1.bf16.msra.mxu0 0
    %542 = vmatprep.subr.bf16.mxu0 0
    %543 = vmatpush1.bf16.msra.mxu0 0
    %544 = vmatprep.mubr.bf16.mxu0 0
    %545 = vmatmul.mubr.bf16.gmra.mrb[0].mxu0 %v510
    %v546 = vpop.f32.mrb[0].mxu0
    %v547 = vadd.f32 %v507, %v546
    %v548 = vpop.f32.mrb[0].mxu0
    %v549 = vpop.f32.mrb[0].mxu0
    %v550 = vadd.f32 %v507, %v549
    %v551 = vpop.f32.mrb[0].mxu0
    %552 = vdwg.mxu0
    %v553 = vadd.f32 %v547, %v51
    %v554 = vadd.f32 %v550, %v52
    %v555 = vsel %vm79, %v553, 0.0
    %556 = vadd.xlane.f32.xlu0 %v555
    %v557 = vpop.xlane.xlu0 %556
    %v558 = vsel %vm79, %v554, 0.0
    %559 = vadd.xlane.f32.xlu0 %v558
    %v560 = vpop.xlane.xlu0 %559
    %v561 = vrcp.pop 32.0
    %v562 = vmul.f32 %v557, %v561
    %v563 = vmul.f32 %v560, %v561
    %v564 = vsub.f32 %v553, %v562
    %v565 = vsub.f32 %v554, %v563
    %v566 = vmul.f32 %v564, %v564
    %v567 = vmul.f32 %v565, %v565
    %v568 = vsel %vm79, %v566, 0.0
    %569 = vadd.xlane.f32.xlu0 %v568
    %v570 = vpop.xlane.xlu0 %569
    %v571 = vsel %vm79, %v567, 0.0
    %572 = vadd.xlane.f32.xlu0 %v571
    %v573 = vpop.xlane.xlu0 %572
    %v574 = vmul.f32 %v570, %v561
    %v575 = vmul.f32 %v573, %v561
    %v576 = vadd.f32 %v574, 1e-12
    %v577 = vadd.f32 %v575, 1e-12
    %v578 = vrsqrt.pop %v576
    %v579 = vrsqrt.pop %v577
    %v580 = vmul.f32 %v564, %v578
    %v581 = vmul.f32 %v565, %v579
    %v582 = vlaneseq
    %v583 = vshrl.u32 %v582, 7
    %v584 = vsub.s32 0, %v583
    %v585 = vrot.slane %v497, %v584
    %v586 = vmul.f32 %v580, %v585
    %v587 = vmul.f32 %v581, %v585
    %589 = vrot.lane.b32.xlu0 %v585, 96
    %v590 = vpop.permute.xlu0 %589
    %v592 = vadd.f32 %v586, %v590
    %v593 = vadd.f32 %v587, %v590
    %v594 = vmul.f32 %v592, 0.5
    %v595 = vmul.f32 %v593, 0.5
    %v596 = vrcp.pop 1.4142135
    %v597 = vmul.f32 %v592, %v596
    %v598 = vmul.f32 %v593, %v596
    %v599 = verf.f32.pop %v597
    %v600 = verf.f32.pop %v598
    %v601 = vadd.f32 %v599, 1.0
    %v602 = vadd.f32 %v600, 1.0
    %v603 = vmul.f32 %v594, %v601
    %v604 = vmul.f32 %v595, %v602
    %v605 = vld [vmem:[%s2] sm:$0xff]
    %v606 = vld [vmem:[%s2 + $0x8] sm:$0xff]
    %608 = vset.pattern.permute.xlu0 0
    %609 = vperm.xlu0 %608, %v605
    %v610 = vpop.permute.xlu0 %609
    %613 = vset.pattern.permute.xlu0 0
    %614 = vperm.xlu0 %613, %v606
    %v615 = vpop.permute.xlu0 %614
    %v617 = vmul.f32 %v603, %v610
    %v618 = vmul.f32 %v604, %v615
    %619 = vst.msk [vmem:[#allocation7] sm:$0xff] %vm79, %v617
    %620 = vst.msk [vmem:[#allocation7 + $0x8] sm:$0xff] %vm79, %v618
    // Predicated region
    $region34: #{tpu_custom_call.1} parent=1 // pred_check
      _
    $region35: #{tpu_custom_call.1} parent=1 // pred_check_branch
      %622 = sbr.rel (0) target = $region37
    $region36: #{tpu_custom_call.1} parent=1 // pred_region
      %s624 = ssub.s32 256, 256
      %625 = vsyncadd [#allocation4], %s624
      %s626 = sshll.u32 [#allocation7], 4
      %s627 = int_to_ptr.vmem [resolvable:$true] %s626
      %632 = dma.vmem_to_hbm [thread:$0]  %s627, 256, %s6, [#allocation4], 128, 128, 8
    $region37: #{tpu_custom_call.1} parent=1 // pred_fallthru
      _
    // Predicated region
    $region38: #{tpu_custom_call.1} parent=1 // pred_check
      _
    $region39: #{tpu_custom_call.1} parent=1 // pred_check_branch
      %634 = sbr.rel (0) target = $region41
    $region40: #{tpu_custom_call.1} parent=1 // pred_region
      %635 = dma.done [#allocation4], 256
    $region41: #{tpu_custom_call.1} parent=1 // pred_fallthru
      _
    %636 = vsyncpa [#allocation3], 1
    %637 = vsyncpa [#allocation6], 1
    %638 = vsyncpa [#allocation4], 1

</llo_original>
